<compile_context>
chip_gen: v6e
topology: v6e:2x2x1
jax: 0.10.0
libtpu: 0.0.40
codegen_flags: <defaults>
</compile_context>

<pallas_src>
import jax
import jax.numpy as jnp
from jax.experimental import pallas as pl
from jax.experimental.pallas import tpu as pltpu


def piche_kernel(x_ref, wb_ref, o_ref):
    # x_ref:  (B, 2)   input rows
    # wb_ref: (3, 2)   rows 0..1 = W^T ([in, out]), row 2 = bias
    # o_ref:  (B, 2)
    x = x_ref[...]
    wb = wb_ref[...]
    # Unrolled 2-deep contraction on the VPU (broadcast mul/add), bias folded in.
    y = (x[:, 0:1] * wb[0:1, :]
         + x[:, 1:2] * wb[1:2, :]
         + wb[2:3, :])
    o_ref[...] = jnp.tanh(y).astype(o_ref.dtype)


def pack_params(weight, bias):
    """One-time parameter prep (hoisted out of the call path).

    weight: [out, in] (PyTorch nn.Linear layout), bias: [out].
    Returns wb: [in + 1, out] with rows 0..in-1 = W^T and last row = bias.
    """
    w_t = weight.T                         # [in, out]
    return jnp.concatenate([w_t, bias.reshape(1, -1)], axis=0)  # [in+1, out]


def piche_forward(x, wb):
    """x: [B, 2] float32, wb: [3, 2] packed (W^T rows + bias row)."""
    B, _ = x.shape
    OUT = wb.shape[1]
    # Tiny overhead-bound op: gridless call, full arrays resident in VMEM.
    return pl.pallas_call(
        piche_kernel,
        out_shape=jax.ShapeDtypeStruct((B, OUT), x.dtype),
        in_specs=[
            pl.BlockSpec(memory_space=pltpu.MemorySpace.VMEM),
            pl.BlockSpec(memory_space=pltpu.MemorySpace.VMEM),
        ],
        out_specs=pl.BlockSpec(memory_space=pltpu.MemorySpace.VMEM),
    )(x, wb)


if __name__ == "__main__":
    key = jax.random.PRNGKey(0)
    k_x, k_w, k_b = jax.random.split(key, 3)

    B, IN, OUT = 8, 2, 2
    x = jax.random.normal(k_x, (B, IN), dtype=jnp.float32)
    # Deterministic parameter init (mimics nn.Linear's uniform(-1/sqrt(in), 1/sqrt(in)))
    bound = 1.0 / jnp.sqrt(jnp.float32(IN))
    weight = jax.random.uniform(k_w, (OUT, IN), minval=-bound, maxval=bound,
                                dtype=jnp.float32)
    bias = jax.random.uniform(k_b, (OUT,), minval=-bound, maxval=bound,
                              dtype=jnp.float32)

    # One-time param packing (not in the per-call path).
    wb = jax.block_until_ready(pack_params(weight, bias))

    out = piche_forward(x, wb)
    out = jax.block_until_ready(out)

    # Reference check in plain JAX (PyTorch semantics: tanh(x @ W^T + b)).
    ref = jnp.tanh(x @ weight.T + bias)
    assert out.shape == (B, OUT)
    assert jnp.allclose(out, ref, atol=1e-5, rtol=1e-5)

    print("KERNEL_OK")
</pallas_src>

<mosaic_0001>
module attributes {stable_mosaic.version = 11 : i64} {
  func.func @piche_kernel(%arg0: memref<8x2xf32, #tpu.memory_space<vmem>>, %arg1: memref<3x2xf32, #tpu.memory_space<vmem>>, %arg2: memref<8x2xf32, #tpu.memory_space<vmem>>) attributes {dimension_semantics = [], scalar_prefetch = 0 : i64, scratch_operands = 0 : i64, tpu.core_type = #tpu.core_type<tc>} {
    %c0 = arith.constant 0 : index
    %c0_0 = arith.constant 0 : index
    %0 = vector.load %arg0[%c0, %c0_0] : memref<8x2xf32, #tpu.memory_space<vmem>>, vector<8x2xf32>
    %c0_1 = arith.constant 0 : index
    %c0_2 = arith.constant 0 : index
    %1 = vector.load %arg1[%c0_1, %c0_2] : memref<3x2xf32, #tpu.memory_space<vmem>>, vector<3x2xf32>
    %2 = vector.extract_strided_slice %0 {offsets = [0, 0], sizes = [8, 1], strides = [1, 1]} : vector<8x2xf32> to vector<8x1xf32>
    %3 = vector.extract_strided_slice %1 {offsets = [0, 0], sizes = [1, 2], strides = [1, 1]} : vector<3x2xf32> to vector<1x2xf32>
    %4 = vector.broadcast %2 : vector<8x1xf32> to vector<8x2xf32>
    %5 = vector.broadcast %3 : vector<1x2xf32> to vector<8x2xf32>
    %6 = arith.mulf %4, %5 : vector<8x2xf32>
    %7 = vector.extract_strided_slice %0 {offsets = [0, 1], sizes = [8, 1], strides = [1, 1]} : vector<8x2xf32> to vector<8x1xf32>
    %8 = vector.extract_strided_slice %1 {offsets = [1, 0], sizes = [1, 2], strides = [1, 1]} : vector<3x2xf32> to vector<1x2xf32>
    %9 = vector.broadcast %7 : vector<8x1xf32> to vector<8x2xf32>
    %10 = vector.broadcast %8 : vector<1x2xf32> to vector<8x2xf32>
    %11 = arith.mulf %9, %10 : vector<8x2xf32>
    %12 = arith.addf %6, %11 : vector<8x2xf32>
    %13 = vector.extract_strided_slice %1 {offsets = [2, 0], sizes = [1, 2], strides = [1, 1]} : vector<3x2xf32> to vector<1x2xf32>
    %14 = vector.broadcast %13 : vector<1x2xf32> to vector<8x2xf32>
    %15 = arith.addf %12, %14 : vector<8x2xf32>
    %16 = math.tanh %15 : vector<8x2xf32>
    %c0_3 = arith.constant 0 : index
    %c0_4 = arith.constant 0 : index
    %17 = vector.load %arg2[%c0_3, %c0_4] : memref<8x2xf32, #tpu.memory_space<vmem>>, vector<8x2xf32>
    tpu.vector_store %arg2[%c0_3, %c0_4], %16 {strides = array<i32>} : memref<8x2xf32, #tpu.memory_space<vmem>>, vector<8x2xf32>,
    return
  }
}

</mosaic_0001>

<llo_original>
// kernel: tpu_custom_call.1
$region0: #{tpu_custom_call.1}
  #allocation0 [shape = 'u32[]', space=smem, size = 0x4, offset = 0x4, fixed_abs, tag = 'smem constant byte address 0x4 - core index']
  #allocation1 [shape = 'u32[144,128]{1,0:T(1,128)}', space=vmem, size = 0x12000, scoped, tag = 'internal scratch']
  %s0 = inlined_call_operand.vmem [shape: f32[8,2], index: 0, kind: input, shape index: {}]
  %s1 = inlined_call_operand.vmem [shape: f32[3,2], index: 1, kind: input, shape index: {}]
  %s2 = inlined_call_operand.vmem [shape: f32[8,2], index: 2, kind: output, shape index: {}]
  %s3 = sld [smem:[#allocation0]]
  $region18: #{tpu_custom_call.1} parent=0
    _
  %s5 = ssub.s32 1, %s3
  %s6 = scalar_select 0, %s5, %s3
  // Predicated region
  $region2: #{tpu_custom_call.1} parent=0 // pred_check
    _
  $region3: #{tpu_custom_call.1} parent=0 // pred_check_branch
    %8 = sbr.rel (0) target = $region5
  $region4: #{tpu_custom_call.1} parent=0 // pred_region
    _
  $region5: #{tpu_custom_call.1} parent=0 // pred_fallthru
    _
  // Predicated region
  $region6: #{tpu_custom_call.1} parent=0 // pred_check
    _
  $region7: #{tpu_custom_call.1} parent=0 // pred_check_branch
    %10 = sbr.rel (0) target = $region9
  $region8: #{tpu_custom_call.1} parent=0 // pred_region
    _
  $region9: #{tpu_custom_call.1} parent=0 // pred_fallthru
    _
  %v11 = vld [vmem:[%s0] sm:$0xff]
  %v12 = vld [vmem:[%s1] sm:$0x7]
  %14 = vset.pattern.permute.xlu0 0
  %15 = vperm.xlu0 %14, %v11
  %v16 = vpop.permute.xlu0 %15
  %v18 = vlaneseq
  %v19 = vshrl.u32 %v18, 7
  %v20 = vsub.s32 0, %v19
  %v21 = vrot.slane %v12, %v20
  %v22 = vmul.f32 %v16, %v21
  %23 = vset.pattern.permute.xlu0 1
  %24 = vperm.xlu0 %23, %v11
  %v25 = vpop.permute.xlu0 %24
  %v27 = vlaneseq
  %v28 = vshrl.u32 %v27, 7
  %v29 = vsub.s32 1, %v28
  %v30 = vrot.slane %v12, %v29
  %v31 = vmul.f32 %v25, %v30
  %v32 = vadd.f32 %v22, %v31
  %v33 = vlaneseq
  %v34 = vshrl.u32 %v33, 7
  %v35 = vsub.s32 2, %v34
  %v36 = vrot.slane %v12, %v35
  %v37 = vadd.f32 %v32, %v36
  %v38 = vtanh.pop %v37
  %vm39 = vcmask 15360
  %40 = vst.msk [vmem:[%s2] sm:$0xff] %vm39, %v38
  // Predicated region
  $region10: #{tpu_custom_call.1} parent=0 // pred_check
    _
  $region11: #{tpu_custom_call.1} parent=0 // pred_check_branch
    %42 = sbr.rel (0) target = $region13
  $region12: #{tpu_custom_call.1} parent=0 // pred_region
    _
  $region13: #{tpu_custom_call.1} parent=0 // pred_fallthru
    _
  // Predicated region
  $region14: #{tpu_custom_call.1} parent=0 // pred_check
    _
  $region15: #{tpu_custom_call.1} parent=0 // pred_check_branch
    %44 = sbr.rel (0) target = $region17
  $region16: #{tpu_custom_call.1} parent=0 // pred_region
    _
  $region17: #{tpu_custom_call.1} parent=0 // pred_fallthru
    _

</llo_original>
